<compile_context>
chip_gen: v5e
topology: v5e:2x2
jax: 0.10.0
libtpu: 0.0.40
codegen_flags: <defaults>
</compile_context>

<pallas_src>
import math

import jax
import jax.numpy as jnp
import numpy as np
from jax.experimental import pallas as pl
from jax.experimental.pallas import tpu as pltpu


def build_positional_encoding(d_model: int, max_len: int, stride: int,
                              dtype=jnp.float32) -> jnp.ndarray:
    """Reproduces PositionalEncoding.__init__ exactly.

    Returns pe of shape (1, max_len * max_len, d_model) in `dtype` (build the
    table directly in the model dtype, e.g. bf16, to avoid in-kernel casts and
    halve PE read traffic).
    """
    d_model_half = int(d_model / 2)
    # torch.linspace(0, (max_len - 1) * stride, max_len)
    position = np.linspace(0.0, (max_len - 1) * stride, max_len, dtype=np.float32)
    pe = np.zeros((max_len, max_len, d_model), dtype=np.float32)
    div_term = np.exp(
        np.arange(0, d_model_half, 2, dtype=np.float32)
        * (-2.0 * math.log(10000.0) / d_model)
    )[None, None, :]  # (1, 1, k)

    # Row-position encodings in first half of channels.
    row = position[:, None, None] * div_term  # (max_len, 1, k)
    pe[:, :, 0:d_model_half:2] = np.sin(row)
    pe[:, :, 1:d_model_half:2] = np.cos(row)

    # Column-position encodings in second half of channels.
    col = position[None, :, None] * div_term  # (1, max_len, k)
    pe[:, :, d_model_half:d_model:2] = np.sin(col)
    pe[:, :, d_model_half + 1:d_model:2] = np.cos(col)

    pe = pe.reshape(max_len * max_len, d_model)[None, :, :]  # (1, L*L, D)
    return jnp.asarray(pe, dtype=dtype)


def _add_pe_kernel(x_ref, pe_ref, o_ref):
    # x_ref / o_ref: (tB, tC); pe_ref: (1, tC) -> sublane broadcast on the VPU.
    o_ref[...] = x_ref[...] + pe_ref[...]


def positional_encoding_forward(x: jnp.ndarray, pe: jnp.ndarray,
                                *, target_tile_bytes: int = 2 * 1024 * 1024
                                ) -> jnp.ndarray:
    """x: (B, S, D); pe: (1, max_len*max_len, D). Returns x + pe[:, :S, :]."""
    B, S, D = x.shape
    N = S * D
    itemsize = jnp.dtype(x.dtype).itemsize

    # Free, layout-preserving reshapes: flatten (S, D) into one lane-dense axis.
    x_flat = x.reshape(B, N)
    # Pass the *full* flattened PE table (no materialized pe[:, :S, :] copy);
    # the BlockSpec index_map selects exactly the first S*D elements. astype is
    # a no-op when dtypes already match.
    pe_flat = pe.reshape(1, -1).astype(x.dtype)  # (1, L*L*D)

    # ---- tile sizing ------------------------------------------------------
    # Sublane tile: full batch if small (block dim == full dim satisfies the
    # (8,128) rule), otherwise 8; boundary blocks are masked by Pallas.
    tB = B if B <= 8 else 8
    if N >= 128:
        # Lane tile: multiple of 128, sized so an x/out tile is ~2 MiB.
        cap = max(128, (target_tile_bytes // itemsize) // tB)
        tC = max(128, (min(cap, N) // 128) * 128)
        pe_in = pe_flat
    else:
        # Tiny-sequence fallback: use a full-extent lane block; slice PE so the
        # block shape equals its full dims (copy is negligible at this size).
        tC = N
        pe_in = pe_flat[:, :N]

    # Grid order (N_tiles, B_tiles): batch is the inner axis, so the PE block
    # index is constant across consecutive steps -> PE is fetched once per
    # N-tile, not once per (N-tile, batch-tile).
    grid = (pl.cdiv(N, tC), pl.cdiv(B, tB))

    out_flat = pl.pallas_call(
        _add_pe_kernel,
        out_shape=jax.ShapeDtypeStruct((B, N), x.dtype),
        grid_spec=pltpu.PrefetchScalarGridSpec(
            num_scalar_prefetch=0,
            grid=grid,
            in_specs=[
                pl.BlockSpec((tB, tC), lambda c, b: (b, c)),   # x
                pl.BlockSpec((1, tC), lambda c, b: (0, c)),    # pe (batch-invariant)
            ],
            out_specs=pl.BlockSpec((tB, tC), lambda c, b: (b, c)),
        ),
        compiler_params=pltpu.CompilerParams(
            dimension_semantics=("parallel", "parallel"),
            vmem_limit_bytes=32 * 1024 * 1024,
        ),
    )(x_flat, pe_in)

    return out_flat.reshape(B, S, D)


if __name__ == "__main__":
    # Small shapes consistent with the module:
    d_model = 32
    max_len = 4
    stride = 2
    batch = 2
    seq = 8  # <= max_len * max_len = 16

    pe = build_positional_encoding(d_model, max_len, stride)

    key = jax.random.PRNGKey(0)
    x = jax.random.normal(key, (batch, seq, d_model), dtype=jnp.float32)

    out = positional_encoding_forward(x, pe)
    out = jax.block_until_ready(out)

    # Reference check against plain-JAX semantics of the PyTorch forward.
    ref = x + pe[:, :seq, :].astype(x.dtype)
    np.testing.assert_allclose(np.asarray(out), np.asarray(ref), rtol=1e-6, atol=1e-6)

    print("KERNEL_OK")
</pallas_src>

<mosaic_0001>
module attributes {stable_mosaic.version = 11 : i64} {
  func.func @_add_pe_kernel(%arg0: i32, %arg1: i32, %arg2: memref<2x256xf32, #tpu.memory_space<vmem>>, %arg3: memref<1x256xf32, #tpu.memory_space<vmem>>, %arg4: memref<2x256xf32, #tpu.memory_space<vmem>>) attributes {dimension_semantics = [#tpu.dimension_semantics<parallel>, #tpu.dimension_semantics<parallel>], iteration_bounds = array<i64: 1, 1>, scalar_prefetch = 0 : i64, scratch_operands = 0 : i64, tpu.core_type = #tpu.core_type<tc>, window_params = [{transform_indices = @transform_0, window_bounds = array<i64: 2, 256>}, {transform_indices = @transform_1, window_bounds = array<i64: 1, 256>}, {transform_indices = @transform_2, window_bounds = array<i64: 2, 256>}]} {
    %c0 = arith.constant 0 : index
    %c0_0 = arith.constant 0 : index
    %0 = vector.load %arg2[%c0, %c0_0] : memref<2x256xf32, #tpu.memory_space<vmem>>, vector<2x256xf32>
    %c0_1 = arith.constant 0 : index
    %c0_2 = arith.constant 0 : index
    %1 = vector.load %arg3[%c0_1, %c0_2] : memref<1x256xf32, #tpu.memory_space<vmem>>, vector<1x256xf32>
    %2 = vector.broadcast %1 : vector<1x256xf32> to vector<2x256xf32>
    %3 = arith.addf %0, %2 : vector<2x256xf32>
    %c0_3 = arith.constant 0 : index
    %c0_4 = arith.constant 0 : index
    %4 = vector.load %arg4[%c0_3, %c0_4] : memref<2x256xf32, #tpu.memory_space<vmem>>, vector<2x256xf32>
    tpu.vector_store %arg4[%c0_3, %c0_4], %3 {strides = array<i32>} : memref<2x256xf32, #tpu.memory_space<vmem>>, vector<2x256xf32>,
    return
  }
  func.func @transform_0(%arg0: i32, %arg1: i32) -> (i32, i32) {
    %c0_i32 = arith.constant 0 : i32
    return %arg1, %arg0 : i32, i32
  }
  func.func @transform_1(%arg0: i32, %arg1: i32) -> (i32, i32) {
    %c0_i32 = arith.constant 0 : i32
    %c0_i32_0 = arith.constant 0 : i32
    return %c0_i32, %arg0 : i32, i32
  }
  func.func @transform_2(%arg0: i32, %arg1: i32) -> (i32, i32) {
    %c0_i32 = arith.constant 0 : i32
    return %arg1, %arg0 : i32, i32
  }
}

</mosaic_0001>

<llo_original>
// kernel: tpu_custom_call.1
$region0: #{tpu_custom_call.1}
  #allocation0 [shape = 'u32[]', space=smem, size = 0x4, offset = 0x4, fixed_abs, tag = 'smem constant byte address 0x4 - core index']
  #allocation1 [shape = 'u32[72,128]{1,0:T(1,128)}', space=vmem, size = 0x9000, scoped, tag = 'internal scratch']
  %s0 = inlined_call_operand.hbm [shape: f32[2,256], index: 0, kind: input, shape index: {}]
  %s1 = inlined_call_operand.hbm [shape: f32[1,512], index: 1, kind: input, shape index: {}]
  %s2 = inlined_call_operand.hbm [shape: f32[2,256], index: 2, kind: output, shape index: {}]
  %s3 = sld [smem:[#allocation0]]
  $region26: #{tpu_custom_call.1} parent=0
    _
  %s5 = ssub.s32 1, %s3
  %s6 = scalar_select 0, %s5, %s3
  $region1: #{tpu_custom_call.1} parent=0
    #allocation2 [shape = 'u8[2048]{0}', space=vmem, size = 0x800, scoped, tag = 'input window, operand 0, single buffered']
    #allocation3 [shape = 's32[1]{0}', space=sflag, size = 0x4, scoped, tag = 'scoped memory for tpu_custom_call.1']
    #allocation4 [shape = 's32[1]{0}', space=sflag, size = 0x4, scoped, tag = 'scoped memory for tpu_custom_call.1']
    #allocation5 [shape = 'u8[1024]{0}', space=vmem, size = 0x400, scoped, tag = 'input window, operand 1, single buffered']
    #allocation6 [shape = 's32[1]{0}', space=sflag, size = 0x4, scoped, tag = 'scoped memory for tpu_custom_call.1']
    #allocation7 [shape = 'u8[2048]{0}', space=vmem, size = 0x800, scoped, tag = 'output window, operand 0, single buffered']
    %7 = vsyncpa [#allocation3], 0
    %8 = vsyncpa [#allocation6], 0
    %9 = vsyncpa [#allocation4], 0
    // Predicated region
    $region2: #{tpu_custom_call.1} parent=1 // pred_check
      _
    $region3: #{tpu_custom_call.1} parent=1 // pred_check_branch
      %11 = sbr.rel (0) target = $region5
    $region4: #{tpu_custom_call.1} parent=1 // pred_region
      %13 = vsyncadd [#allocation3], 0
      %s15 = sshll.u32 %s0, 4
      %s16 = int_to_ptr.hbm [resolvable:$true] %s15
      %s17 = sshll.u32 [#allocation2], 4
      %s18 = int_to_ptr.vmem [resolvable:$true] %s17
      %20 = dma.hbm_to_vmem [thread:$0]  %s16, 64, %s18, [#allocation3]
    $region5: #{tpu_custom_call.1} parent=1 // pred_fallthru
      _
    // Predicated region
    $region6: #{tpu_custom_call.1} parent=1 // pred_check
      _
    $region7: #{tpu_custom_call.1} parent=1 // pred_check_branch
      %22 = sbr.rel (0) target = $region9
    $region8: #{tpu_custom_call.1} parent=1 // pred_region
      %24 = vsyncadd [#allocation6], 0
      %s26 = sshll.u32 %s1, 4
      %s27 = int_to_ptr.hbm [resolvable:$true] %s26
      %s28 = sshll.u32 [#allocation5], 4
      %s29 = int_to_ptr.vmem [resolvable:$true] %s28
      %31 = dma.hbm_to_vmem [thread:$0]  %s27, 32, %s29, [#allocation6]
    $region9: #{tpu_custom_call.1} parent=1 // pred_fallthru
      _
    // Predicated region
    $region10: #{tpu_custom_call.1} parent=1 // pred_check
      _
    $region11: #{tpu_custom_call.1} parent=1 // pred_check_branch
      %33 = sbr.rel (0) target = $region13
    $region12: #{tpu_custom_call.1} parent=1 // pred_region
      %35 = dma.done [#allocation3], 64
    $region13: #{tpu_custom_call.1} parent=1 // pred_fallthru
      _
    // Predicated region
    $region14: #{tpu_custom_call.1} parent=1 // pred_check
      _
    $region15: #{tpu_custom_call.1} parent=1 // pred_check_branch
      %37 = sbr.rel (0) target = $region17
    $region16: #{tpu_custom_call.1} parent=1 // pred_region
      %39 = dma.done [#allocation6], 32
    $region17: #{tpu_custom_call.1} parent=1 // pred_fallthru
      _
    %v40 = vld [vmem:[#allocation2] sm:$0xf]
    %v41 = vld [vmem:[#allocation5] sm:$0x3]
    %v43 = vperm.slane %v41, 0
    %v44 = vperm.slane %v41, 1
    %v45 = vrot.slane %v44, 6
    %vm46 = vcmask 1041408
    %v47 = vsel %vm46, %v43, %v45
    %v49 = vadd.f32 %v40, %v47
    %50 = vst [vmem:[#allocation7] sm:$0xf] %v49
    // Predicated region
    $region18: #{tpu_custom_call.1} parent=1 // pred_check
      _
    $region19: #{tpu_custom_call.1} parent=1 // pred_check_branch
      %52 = sbr.rel (0) target = $region21
    $region20: #{tpu_custom_call.1} parent=1 // pred_region
      %54 = vsyncadd [#allocation4], 0
      %s56 = sshll.u32 [#allocation7], 4
      %s57 = int_to_ptr.vmem [resolvable:$true] %s56
      %s58 = sshll.u32 %s2, 4
      %s59 = int_to_ptr.hbm [resolvable:$true] %s58
      %61 = dma.vmem_to_hbm [thread:$0]  %s57, 64, %s59, [#allocation4]
    $region21: #{tpu_custom_call.1} parent=1 // pred_fallthru
      _
    // Predicated region
    $region22: #{tpu_custom_call.1} parent=1 // pred_check
      _
    $region23: #{tpu_custom_call.1} parent=1 // pred_check_branch
      %63 = sbr.rel (0) target = $region25
    $region24: #{tpu_custom_call.1} parent=1 // pred_region
      %65 = dma.done [#allocation4], 64
    $region25: #{tpu_custom_call.1} parent=1 // pred_fallthru
      _
    %66 = vsyncpa [#allocation3], 1
    %67 = vsyncpa [#allocation6], 1
    %68 = vsyncpa [#allocation4], 1

</llo_original>
